<compile_context>
chip_gen: v7x
topology: tpu7x:2x2x1
jax: 0.10.0
libtpu: 0.0.40
codegen_flags: <defaults>
</compile_context>

<pallas_src>
import jax
import jax.numpy as jnp
from jax.experimental import pallas as pl
from jax.experimental.pallas import tpu as pltpu


# ---------------------------------------------------------------------------
# Hardware introspection (defensive: falls back to safe defaults).
# ---------------------------------------------------------------------------

def _vmem_budget_bytes() -> int:
    """Per-generation scoped-VMEM limit to request (with headroom)."""
    physical = 128 * 1024 * 1024
    try:
        physical = int(pltpu.get_tpu_info().vmem_capacity_bytes)
    except Exception:
        pass
    # ~25% headroom for Mosaic internal scratch. v5e/v6e (128 MiB) -> 96 MiB,
    # v7x (64 MiB) -> 48 MiB.  Never exceed 96 MiB.
    return min((physical * 3) // 4, 96 * 1024 * 1024)


def _num_tensorcores() -> int:
    """Best-effort TensorCores-per-chip query (v7x has 2, v5e/v6e have 1)."""
    try:
        info = pltpu.get_tpu_info()
    except Exception:
        return 1
    for name in ("num_cores", "num_tensorcores", "tensorcores_per_chip",
                 "core_count", "cores_per_chip"):
        v = getattr(info, name, None)
        if isinstance(v, int) and v > 0:
            return v
    return 1


def _sublane_multiple(dtype) -> int:
    """Row-tile rounding unit: sub-32-bit dtypes pack along sublanes."""
    itemsize = jnp.dtype(dtype).itemsize
    return max(8, (4 // max(1, itemsize)) * 8)  # f32:8, bf16/f16:16, int8:32


# ---------------------------------------------------------------------------
# Path 1: direct HBM -> HBM DMA copy (no VMEM staging, no grid).
# ---------------------------------------------------------------------------

def _dma_copy_kernel(x_hbm, o_hbm, sem):
    cp = pltpu.make_async_copy(x_hbm, o_hbm, sem)
    cp.start()
    cp.wait()


def _dma_copy(x: jax.Array) -> jax.Array:
    nbytes = x.size * x.dtype.itemsize
    return pl.pallas_call(
        _dma_copy_kernel,
        out_shape=jax.ShapeDtypeStruct(x.shape, x.dtype),
        in_specs=[pl.BlockSpec(memory_space=pl.ANY)],
        out_specs=pl.BlockSpec(memory_space=pl.ANY),
        scratch_shapes=[pltpu.SemaphoreType.DMA],
        cost_estimate=pl.CostEstimate(
            flops=0, transcendentals=0, bytes_accessed=2 * nbytes),
    )(x)


# ---------------------------------------------------------------------------
# Path 2: lane-dense, row-tiled, pipelined VMEM copy.
# ---------------------------------------------------------------------------

def _copy_kernel(x_ref, o_ref):
    o_ref[...] = x_ref[...]


def _choose_lane_cols(total: int) -> int:
    """Largest lane-dense (multiple-of-128) column count dividing `total`.

    `total` is always a multiple of 128 here (caller pads), so this never
    falls back to a non-lane-dense width.
    """
    for cols in (1024, 512, 256, 128):
        if total % cols == 0:
            return cols
    return 128


def _choose_tile_rows(rows: int, bytes_per_row: int, packing: int,
                      target_bytes: int) -> int:
    t = (target_bytes // max(1, bytes_per_row)) // packing * packing
    t = max(packing, t)
    if t >= rows:
        return rows  # single full-extent row block: always a legal block shape
    return t         # ragged last block handled by the cdiv grid


def _vmem_tiled_copy_2d(x2d: jax.Array) -> jax.Array:
    rows, cols = x2d.shape
    itemsize = x2d.dtype.itemsize
    packing = _sublane_multiple(x2d.dtype)
    budget = _vmem_budget_bytes()
    # 4 live buffers (double-buffered in + out); ~8 MiB tiles on v6e/v7x,
    # capped so the in-flight footprint stays well inside `budget`.
    tile_bytes = max(512 * 1024, min(8 * 1024 * 1024, budget // 6))
    tile_r = _choose_tile_rows(rows, cols * itemsize, packing, tile_bytes)
    grid_r = pl.cdiv(rows, tile_r)

    n_cores = _num_tensorcores()
    if n_cores >= 2 and grid_r >= n_cores:
        dim_sem = (pltpu.CORE_PARALLEL,)   # v7x: shard rows across both TCs
    else:
        dim_sem = (pltpu.PARALLEL,)

    return pl.pallas_call(
        _copy_kernel,
        out_shape=jax.ShapeDtypeStruct((rows, cols), x2d.dtype),
        grid=(grid_r,),
        in_specs=[pl.BlockSpec((tile_r, cols), lambda i: (i, 0))],
        out_specs=pl.BlockSpec((tile_r, cols), lambda i: (i, 0)),
        compiler_params=pltpu.CompilerParams(
            dimension_semantics=dim_sem,
            vmem_limit_bytes=int(budget),
        ),
        cost_estimate=pl.CostEstimate(
            flops=0, transcendentals=0,
            bytes_accessed=2 * rows * cols * itemsize),
    )(x2d)


def _vmem_tiled_copy(x: jax.Array, out_shape) -> jax.Array:
    total = x.size
    pad = (-total) % 128
    flat = x.reshape(-1)
    if pad:
        # Pad to a lane-dense slab rather than collapsing to one giant block.
        flat = jnp.pad(flat, (0, pad))
    padded = total + pad
    cols = _choose_lane_cols(padded)
    rows = padded // cols
    y2d = _vmem_tiled_copy_2d(flat.reshape(rows, cols))
    if pad:
        return y2d.reshape(-1)[:total].reshape(out_shape)
    return y2d.reshape(out_shape)


# ---------------------------------------------------------------------------
# Public entry point (matches torch Squeeze.forward semantics).
# ---------------------------------------------------------------------------

def squeeze_pallas(x: jax.Array, dim: int = -1, *, materialize: bool = False,
                   method: str = "dma", donatable: bool = False) -> jax.Array:
    """Equivalent of torch.Tensor.squeeze(dim=dim).

    Default: metadata-only (no kernel launch).  materialize=True forces an
    explicit HBM copy through Pallas ("dma" = direct HBM->HBM DMA,
    "vmem" = tiled pipelined VMEM copy).  If the caller can donate x
    (donatable=True) the copy is pointless and is skipped entirely.
    """
    ndim = x.ndim
    d = dim if dim >= 0 else dim + ndim

    if x.shape[d] != 1:
        # torch semantics: squeezing a non-size-1 dim is the identity.
        return x

    out_shape = x.shape[:d] + x.shape[d + 1:]

    if not materialize or donatable or x.size == 0:
        # Squeeze is pure metadata: a reshape costs nothing.
        return x.reshape(out_shape)

    if method == "dma":
        return _dma_copy(x.reshape(out_shape))
    return _vmem_tiled_copy(x, out_shape)


if __name__ == "__main__":
    key = jax.random.PRNGKey(0)
    # Shape consistent with the module: last dim of size 1 gets squeezed.
    x = jax.random.normal(key, (2, 4, 16, 1), dtype=jnp.float32)
    y_ref = jnp.squeeze(x, axis=-1)

    # Default fast path: metadata-only, no kernel launch (the real forward).
    y_fast = jax.block_until_ready(squeeze_pallas(x, dim=-1))
    assert y_fast.shape == (2, 4, 16), y_fast.shape
    assert bool(jnp.array_equal(y_fast, y_ref))

    # Materialized copy via direct HBM->HBM DMA (no VMEM staging).
    y_dma = jax.block_until_ready(squeeze_pallas(x, dim=-1, materialize=True,
                                                 method="dma"))
    assert y_dma.shape == (2, 4, 16) and y_dma.dtype == x.dtype
    assert bool(jnp.array_equal(y_dma, y_ref))

    # Materialized copy via the tiled, pipelined VMEM path.
    y_vmem = jax.block_until_ready(squeeze_pallas(x, dim=-1, materialize=True,
                                                  method="vmem"))
    assert y_vmem.shape == (2, 4, 16)
    assert bool(jnp.array_equal(y_vmem, y_ref))

    # bf16 exercises the sublane-packing-aware row tiling.
    xb = x.astype(jnp.bfloat16)
    yb = jax.block_until_ready(squeeze_pallas(xb, dim=-1, materialize=True,
                                              method="vmem"))
    assert yb.dtype == jnp.bfloat16
    assert bool(jnp.array_equal(yb, jnp.squeeze(xb, axis=-1)))

    # Total not divisible by 128 -> padded lane-dense path (robustness fix).
    x3 = jax.random.normal(jax.random.PRNGKey(1), (3, 5, 7, 1),
                           dtype=jnp.float32)
    y3 = jax.block_until_ready(squeeze_pallas(x3, dim=-1, materialize=True,
                                              method="vmem"))
    assert y3.shape == (3, 5, 7)
    assert bool(jnp.array_equal(y3, jnp.squeeze(x3, axis=-1)))

    # dim size != 1 -> torch semantics: identity, no kernel, no copy.
    x2 = jax.random.normal(jax.random.PRNGKey(2), (2, 4, 16, 16),
                           dtype=jnp.float32)
    y2 = jax.block_until_ready(squeeze_pallas(x2, dim=-1))
    assert y2.shape == x2.shape
    assert bool(jnp.array_equal(y2, x2))

    print("KERNEL_OK")
</pallas_src>

<mosaic_0001>
module attributes {stable_mosaic.version = 11 : i64} {
  func.func @_dma_copy_kernel(%arg0: memref<2x4x16xf32, #tpu.memory_space<any>>, %arg1: memref<2x4x16xf32, #tpu.memory_space<any>>, %arg2: memref<!tpu.dma_semaphore, #tpu.memory_space<semaphore_mem>>) attributes {dimension_semantics = [], scalar_prefetch = 0 : i64, scratch_operands = 1 : i64, tpu.core_type = #tpu.core_type<tc>} {
    tpu.enqueue_dma source(%arg0 : memref<2x4x16xf32, #tpu.memory_space<any>>) target(%arg1 : memref<2x4x16xf32, #tpu.memory_space<any>>) target_semaphore(%arg2 : memref<!tpu.dma_semaphore, #tpu.memory_space<semaphore_mem>>)
    tpu.wait_dma2 semaphore(%arg2 : memref<!tpu.dma_semaphore, #tpu.memory_space<semaphore_mem>>) src(%arg0 : memref<2x4x16xf32, #tpu.memory_space<any>>) dst(%arg1 : memref<2x4x16xf32, #tpu.memory_space<any>>)
    return
  }
}

</mosaic_0001>

<llo_original>
// kernel: tpu_custom_call.1
$region0: #{tpu_custom_call.1}
  #allocation0 [shape = 'u32[]', space=smem, size = 0x4, offset = 0x4, fixed_abs, tag = 'smem constant byte address 0x4 - core index']
  #allocation1 [shape = 'u32[144,128]{1,0:T(1,128)}', space=vmem, size = 0x12000, scoped, tag = 'internal scratch']
  #allocation2 [shape = 's32[1]{0}', space=sflag, size = 0x4, scoped, tag = 'scratch operand']
  #allocation3 [shape = 's32[]', space=sflag, size = 0x4, offset = 0, fixed_abs, tag = 'sflag constant byte address 0x0 - dummy sync flag']
  #allocation4 [shape = 'u32[0]{0}', space=smem, size = 0, offset = 0, fixed_abs, tag = 'smem constant byte address 0x0 - null']
  %s0 = inlined_call_operand.hbm [shape: f32[2,4,16], index: 0, kind: input, shape index: {}]
  %s1 = inlined_call_operand.hbm [shape: f32[2,4,16], index: 1, kind: output, shape index: {}]
  %s2 = sld [smem:[#allocation0]]
  $region2: #{tpu_custom_call.1} parent=0
    _
  %s4 = ssub.s32 1, %s2
  %s5 = scalar_select 0, %s4, %s2
  %s7 = sshll.u32 1, 14
  %s8 = sxor.u32 4294967295, %s7
  %s11 = sshll.u32 3, 24
  %s12 = sxor.u32 4294967295, %s11
  %s13 = sand.u32 0, %s12
  %s15 = sor.u32 %s13, 0
  %18 = dma.general %s0, 128, %s1, [#allocation2], [#allocation3], [#allocation4], %s15, 0
  %s19 = smul.u32 2, 4
  %s20 = smul.u32 %s19, 1
  %s21 = sshll.u32 %s20, 4
  %22 = dma.done [#allocation2], %s21
  %23 = vsyncmov [#allocation2]
  %s24 = vpop.sfrf %23
  %p25 = scmp.eq.s32.totalorder %s24, 0
  %p26 = pneg %p25
  %28 = shalt.err (%p26)

</llo_original>
